<compile_context>
chip_gen: v5e
topology: v5e:2x2
jax: 0.10.0
libtpu: 0.0.40
codegen_flags: <defaults>
</compile_context>

<pallas_src>
import functools

import numpy as np
import jax
import jax.numpy as jnp
from jax.experimental import pallas as pl
from jax.experimental.pallas import tpu as pltpu


# ----------------------------------------------------------------------------
# Glue: pooling / upsampling factor matrices (match PyTorch semantics).
# ----------------------------------------------------------------------------
def _adaptive_avg_pool_matrix(in_size: int, out_size: int) -> np.ndarray:
    """P[i, j] = 1/len(bin_i) if j in bin_i, matching nn.AdaptiveAvgPool2d."""
    P = np.zeros((out_size, in_size), np.float64)
    for i in range(out_size):
        start = (i * in_size) // out_size
        end = -((-(i + 1) * in_size) // out_size)  # ceil((i+1)*in/out)
        P[i, start:end] = 1.0 / float(end - start)
    return P


def _bilinear_upsample_matrix(out_size: int, in_size: int,
                              align_corners: bool = False) -> np.ndarray:
    """U[dst, src] bilinear weights.  align_corners=False matches the current
    F.interpolate default; True matches PSPNet-era F.upsample."""
    U = np.zeros((out_size, in_size), np.float64)
    for d in range(out_size):
        if align_corners:
            src = 0.0 if out_size == 1 else d * (in_size - 1) / (out_size - 1)
        else:
            src = max((d + 0.5) * (in_size / out_size) - 0.5, 0.0)
        i0 = min(int(np.floor(src)), in_size - 1)
        i1 = min(i0 + 1, in_size - 1)
        frac = src - i0
        U[d, i0] += 1.0 - frac
        U[d, i1] += frac
    return U


def _build_spatial_operators(H, W, sizes, hw_pad, s2_pad, align_corners):
    """D: (HW, S2_real) pooling operator (x_flat @ D -> packed pooled panel).
    U: (s2_pad, hw_pad) packed upsample operator (panel @ U -> upsampled),
    stage rows packed back-to-back, padding rows/cols zero."""
    HW = H * W
    s2_real = sum(s * s for s in sizes)
    D = np.zeros((HW, s2_real), np.float32)
    U = np.zeros((s2_pad, hw_pad), np.float32)
    off = 0
    for s in sizes:
        Ph = _adaptive_avg_pool_matrix(H, s)
        Pw = _adaptive_avg_pool_matrix(W, s)
        Uh = _bilinear_upsample_matrix(H, s, align_corners)
        Uw = _bilinear_upsample_matrix(W, s, align_corners)
        D[:, off:off + s * s] = np.kron(Ph, Pw).T        # (HW, s*s)
        U[off:off + s * s, :HW] = np.kron(Uh, Uw).T      # (s*s, HW)
        off += s * s
    return D, U


# ----------------------------------------------------------------------------
# Pallas kernel.
# Grid = (N, F_out // f_tile, C // c_tile); the C axis is a reduction.
# ----------------------------------------------------------------------------
def psp_kernel(x_ref, t_ref, u_ref, wid_ref, b_ref, o_ref, *, hw_real):
    # x_ref  : (1, c_tile, HW_pad)   bf16 input tile (flattened spatial)
    # t_ref  : (1, f_tile, S2)       bf16 packed pooled panel (already mixed)
    # u_ref  : (S2, HW_pad)          bf16 packed bilinear upsample operator
    # wid_ref: (f_tile, c_tile)      bf16 identity block of the bottleneck conv
    # b_ref  : (f_tile, 1)           f32 bottleneck bias
    # o_ref  : (1, f_tile, HW_pad)   f32 output tile (doubles as accumulator)
    c = pl.program_id(2)

    @pl.when(c == 0)
    def _init():
        o_ref[...] = jnp.zeros_like(o_ref)

    # Identity branch of the bottleneck 1x1 conv, reduced over channel tiles
    # directly into the resident f32 output block (block index constant in c).
    o_ref[0] += jnp.dot(wid_ref[...], x_ref[0],
                        preferred_element_type=jnp.float32)

    @pl.when(c == pl.num_programs(2) - 1)
    def _finalize():
        # One batched bilinear upsample for all pyramid stages (K = S2 = 128).
        up = jnp.dot(t_ref[0], u_ref[...], preferred_element_type=jnp.float32)
        out = jnp.maximum(o_ref[0] + up + b_ref[...], 0.0)
        # Zero the spatial padding columns (would otherwise hold relu(bias)).
        lane = jax.lax.broadcasted_iota(jnp.int32, out.shape, 1)
        o_ref[0] = jnp.where(lane < hw_real, out, 0.0)


# ----------------------------------------------------------------------------
# Wrapper
# ----------------------------------------------------------------------------
def psp_module(x, wc, wb, bb, sizes=(1, 2, 3, 6), *, f_tile=None, c_tile=None,
               align_corners=False, compute_dtype=jnp.bfloat16):
    """x: (N, C, H, W) NCHW.  wc: (n_stages, C, C) per-stage 1x1 convs (no
    bias).  wb: (F, (n_stages+1)*C) bottleneck 1x1 conv weight.  bb: (F,) bias.
    Returns relu(bottleneck(cat(upsampled priors, x))) as (N, F, H, W) f32."""
    N, C, H, W = x.shape
    F_out = wb.shape[0]
    n_stages = len(sizes)
    HW = H * W
    HW_pad = 128 * pl.cdiv(HW, 128)               # lane-dense output stores
    S2_real = sum(s * s for s in sizes)           # 50 for (1,2,3,6)
    S2 = 128 * pl.cdiv(S2_real, 128)              # single packed pooled panel

    # ---- tile heuristics ----------------------------------------------------
    if c_tile is None:
        c_tile = C if C <= 256 else (256 if C % 256 == 0 else C)
    if f_tile is None:
        # Prefer a single F pass: x is then streamed from HBM exactly once.
        if F_out <= 512 or F_out % 256 != 0 or F_out * HW_pad * 8 <= (32 << 20):
            f_tile = F_out
        else:
            f_tile = 256
    assert C % c_tile == 0 and F_out % f_tile == 0
    assert c_tile == C or c_tile % 128 == 0, "channel tile must be lane aligned"
    assert f_tile == F_out or f_tile % 16 == 0, "F tile must be sublane aligned"
    n_f = F_out // f_tile

    # ---- wrapper-side glue (tiny, f32): pooling + fused stage/bottleneck mix
    D_np, U_np = _build_spatial_operators(H, W, sizes, HW_pad, S2, align_corners)
    x32 = x.reshape(N, C, HW).astype(jnp.float32)
    pooled = jnp.einsum('nci,ik->nck', x32, jnp.asarray(D_np))   # (N, C, S2_real)
    wb32 = wb.astype(jnp.float32)
    offs = np.cumsum([0] + [s * s for s in sizes])
    t_blocks = []
    for si in range(n_stages):
        wf = wb32[:, si * C:(si + 1) * C] @ wc[si].astype(jnp.float32)  # (F, C)
        t_blocks.append(jnp.einsum('fc,nck->nfk', wf,
                                   pooled[:, :, offs[si]:offs[si + 1]]))
    t = jnp.concatenate(t_blocks, axis=2)                        # (N, F, S2_real)
    t = jnp.pad(t, ((0, 0), (0, 0), (0, S2 - S2_real))).astype(compute_dtype)

    u_arr = jnp.asarray(U_np).astype(compute_dtype)              # (S2, HW_pad)
    wid = wb32[:, n_stages * C:].astype(compute_dtype)           # (F, C)
    b2d = bb.reshape(F_out, 1).astype(jnp.float32)

    x_flat = x.reshape(N, C, HW).astype(compute_dtype)
    if HW_pad != HW:
        x_flat = jnp.pad(x_flat, ((0, 0), (0, 0), (0, HW_pad - HW)))

    # ---- VMEM budget + cost estimate ---------------------------------------
    vmem_need = 2 * (c_tile * HW_pad * 2        # x tile (bf16, double buffered)
                     + f_tile * S2 * 2          # packed pooled panel tile
                     + S2 * HW_pad * 2          # upsample operator
                     + f_tile * c_tile * 2      # identity weight tile
                     + f_tile * 4               # bias
                     + f_tile * HW_pad * 4)     # resident f32 output tile
    try:
        vmem_cap = pltpu.get_tpu_info().vmem_capacity_bytes
    except Exception:
        vmem_cap = 64 * 1024 * 1024
    vmem_limit = int(min(max(2 * vmem_need, 32 << 20), int(0.9 * vmem_cap)))

    flops = 2 * N * F_out * (C + S2) * HW_pad    # identity branch + upsample
    bytes_accessed = int(
        n_f * N * C * HW_pad * 2                 # x is re-streamed per F tile
        + N * F_out * C * 2                      # identity weight block
        + N * F_out * S2 * 2                     # packed pooled panel
        + S2 * HW_pad * 2                        # upsample operator
        + F_out * 4                              # bias
        + N * F_out * HW_pad * 4)                # output writeback
    cost = pl.CostEstimate(flops=int(flops), transcendentals=0,
                           bytes_accessed=bytes_accessed)

    kernel = functools.partial(psp_kernel, hw_real=HW)

    out = pl.pallas_call(
        kernel,
        out_shape=jax.ShapeDtypeStruct((N, F_out, HW_pad), jnp.float32),
        grid_spec=pltpu.PrefetchScalarGridSpec(
            num_scalar_prefetch=0,
            grid=(N, n_f, C // c_tile),
            in_specs=[
                pl.BlockSpec((1, c_tile, HW_pad), lambda n, f, c: (n, c, 0)),
                pl.BlockSpec((1, f_tile, S2), lambda n, f, c: (n, f, 0)),
                pl.BlockSpec((S2, HW_pad), lambda n, f, c: (0, 0)),
                pl.BlockSpec((f_tile, c_tile), lambda n, f, c: (f, c)),
                pl.BlockSpec((f_tile, 1), lambda n, f, c: (f, 0)),
            ],
            out_specs=pl.BlockSpec((1, f_tile, HW_pad),
                                   lambda n, f, c: (n, f, 0)),
        ),
        compiler_params=pltpu.CompilerParams(
            dimension_semantics=("parallel", "parallel", "arbitrary"),
            vmem_limit_bytes=vmem_limit,
        ),
        cost_estimate=cost,
    )(x_flat, t, u_arr, wid, b2d)

    if HW_pad != HW:
        out = out[:, :, :HW]
    return out.reshape(N, F_out, H, W)


# ----------------------------------------------------------------------------
# Pure numpy (float64) reference mirroring the PyTorch module, independent of
# the kernel's fused/packed weight preparation.
# ----------------------------------------------------------------------------
def psp_reference(x, wc, wb, bb, sizes=(1, 2, 3, 6), align_corners=False):
    x = np.asarray(x, np.float64)
    wc = np.asarray(wc, np.float64)
    wb = np.asarray(wb, np.float64)
    bb = np.asarray(bb, np.float64)
    N, C, H, W = x.shape
    HW = H * W
    xf = x.reshape(N, C, HW)
    priors = []
    for i, s in enumerate(sizes):
        Dm = np.kron(_adaptive_avg_pool_matrix(H, s),
                     _adaptive_avg_pool_matrix(W, s))            # (s*s, HW)
        Um = np.kron(_bilinear_upsample_matrix(H, s, align_corners),
                     _bilinear_upsample_matrix(W, s, align_corners))  # (HW,s*s)
        pooled = np.einsum('nci,ki->nck', xf, Dm)                 # adaptive pool
        mixed = np.einsum('dc,nck->ndk', wc[i], pooled)           # 1x1 conv
        priors.append(np.einsum('ndk,ok->ndo', mixed, Um))        # upsample
    priors.append(xf)
    cat = np.concatenate(priors, axis=1)                          # (N, 5C, HW)
    out = np.einsum('fc,nco->nfo', wb, cat) + bb[None, :, None]
    return np.maximum(out, 0.0).reshape(N, wb.shape[0], H, W)


if __name__ == "__main__":
    key = jax.random.PRNGKey(0)
    sizes = (1, 2, 3, 6)
    configs = [
        # Tiny config; exercises the align_corners=True (PSPNet-era) path.
        dict(N=2, C=4, H=16, W=16, F_out=32, f_tile=None, c_tile=None,
             align_corners=True),
        # Exercises the channel reduction (2 steps), F tiling (2 tiles) and
        # spatial padding/masking (HW = 320 -> HW_pad = 384).
        dict(N=2, C=256, H=16, W=20, F_out=128, f_tile=64, c_tile=128,
             align_corners=False),
    ]
    for cfg in configs:
        k1, k2, k3, k4, key = jax.random.split(key, 5)
        N, C, H, W, F_out = cfg["N"], cfg["C"], cfg["H"], cfg["W"], cfg["F_out"]
        x = jax.random.normal(k1, (N, C, H, W), jnp.float32)
        wc = 0.1 * jax.random.normal(k2, (len(sizes), C, C), jnp.float32)
        wb = (0.1 / np.sqrt(C)) * jax.random.normal(
            k3, (F_out, C * (len(sizes) + 1)), jnp.float32)
        bb = 0.1 * jax.random.normal(k4, (F_out,), jnp.float32)

        y = psp_module(x, wc, wb, bb, sizes, f_tile=cfg["f_tile"],
                       c_tile=cfg["c_tile"],
                       align_corners=cfg["align_corners"])
        jax.block_until_ready(y)
        assert y.shape == (N, F_out, H, W)

        y_ref = psp_reference(x, wc, wb, bb, sizes, cfg["align_corners"])
        # bf16 matmul operands with f32 accumulation -> loose tolerance vs f64.
        np.testing.assert_allclose(np.asarray(y, np.float64), y_ref,
                                   rtol=2e-2, atol=2e-2)

    print("KERNEL_OK")
</pallas_src>

<mosaic_0001>
module attributes {stable_mosaic.version = 11 : i64} {
  func.func @psp_kernel(%arg0: i32, %arg1: i32, %arg2: i32, %arg3: memref<1x4x256xbf16, #tpu.memory_space<vmem>>, %arg4: memref<1x32x128xbf16, #tpu.memory_space<vmem>>, %arg5: memref<128x256xbf16, #tpu.memory_space<vmem>>, %arg6: memref<32x4xbf16, #tpu.memory_space<vmem>>, %arg7: memref<32x1xf32, #tpu.memory_space<vmem>>, %arg8: memref<1x32x256xf32, #tpu.memory_space<vmem>>) attributes {dimension_semantics = [#tpu.dimension_semantics<parallel>, #tpu.dimension_semantics<parallel>, #tpu.dimension_semantics<arbitrary>], iteration_bounds = array<i64: 2, 1, 1>, scalar_prefetch = 0 : i64, scratch_operands = 0 : i64, tpu.core_type = #tpu.core_type<tc>, window_params = [{transform_indices = @transform_0, window_bounds = array<i64: 1, 4, 256>}, {transform_indices = @transform_1, window_bounds = array<i64: 1, 32, 128>}, {pipeline_mode = #tpu.pipeline_mode<synchronous>, transform_indices = @transform_2, window_bounds = array<i64: 128, 256>}, {transform_indices = @transform_3, window_bounds = array<i64: 32, 4>}, {transform_indices = @transform_4, window_bounds = array<i64: 32, 1>}, {transform_indices = @transform_5, window_bounds = array<i64: 1, 32, 256>}]} {
    %c0_i32 = arith.constant 0 : i32
    %0 = arith.cmpi eq, %arg2, %c0_i32 : i32
    %1 = arith.extui %0 : i1 to i32
    %c0_i32_0 = arith.constant 0 : i32
    %2 = arith.cmpi ne, %1, %c0_i32_0 : i32
    scf.if %2 {
      %cst_13 = arith.constant 0.000000e+00 : f32
      %16 = vector.broadcast %cst_13 : f32 to vector<1x32x256xf32>
      %c0_14 = arith.constant 0 : index
      %c0_15 = arith.constant 0 : index
      %c0_16 = arith.constant 0 : index
      %17 = vector.load %arg8[%c0_14, %c0_15, %c0_16] : memref<1x32x256xf32, #tpu.memory_space<vmem>>, vector<1x32x256xf32>
      tpu.vector_store %arg8[%c0_14, %c0_15, %c0_16], %16 {strides = array<i32>} : memref<1x32x256xf32, #tpu.memory_space<vmem>>, vector<1x32x256xf32>,
    } else {
    }
    %c0 = arith.constant 0 : index
    %c0_1 = arith.constant 0 : index
    %c0_2 = arith.constant 0 : index
    %3 = vector.load %arg8[%c0, %c0_1, %c0_2] : memref<1x32x256xf32, #tpu.memory_space<vmem>>, vector<1x32x256xf32>
    %4 = vector.shape_cast %3 : vector<1x32x256xf32> to vector<32x256xf32>
    %c0_3 = arith.constant 0 : index
    %c0_4 = arith.constant 0 : index
    %5 = vector.load %arg6[%c0_3, %c0_4] : memref<32x4xbf16, #tpu.memory_space<vmem>>, vector<32x4xbf16>
    %c0_5 = arith.constant 0 : index
    %c0_6 = arith.constant 0 : index
    %c0_7 = arith.constant 0 : index
    %6 = vector.load %arg3[%c0_5, %c0_6, %c0_7] : memref<1x4x256xbf16, #tpu.memory_space<vmem>>, vector<1x4x256xbf16>
    %7 = vector.shape_cast %6 : vector<1x4x256xbf16> to vector<4x256xbf16>
    %cst = arith.constant dense<0.000000e+00> : vector<32x256xf32>
    %8 = tpu.matmul %5, %7, %cst {dimension_numbers = #tpu.dot_dimension_numbers<[1], [0], [0], [1], [0, 0, 1, 1], [], []>} : vector<32x4xbf16>, vector<4x256xbf16>, vector<32x256xf32> -> vector<32x256xf32>
    %9 = arith.addf %4, %8 : vector<32x256xf32>
    %c0_8 = arith.constant 0 : index
    %c0_9 = arith.constant 0 : index
    %c0_10 = arith.constant 0 : index
    %10 = vector.load %arg8[%c0_8, %c0_9, %c0_10] : memref<1x32x256xf32, #tpu.memory_space<vmem>>, vector<1x32x256xf32>
    %11 = vector.shape_cast %10 : vector<1x32x256xf32> to vector<32x256xf32>
    %12 = vector.shape_cast %9 : vector<32x256xf32> to vector<1x32x256xf32>
    tpu.vector_store %arg8[%c0_8, %c0_9, %c0_10], %12 {strides = array<i32>} : memref<1x32x256xf32, #tpu.memory_space<vmem>>, vector<1x32x256xf32>,
    %c0_i32_11 = arith.constant 0 : i32
    %13 = arith.cmpi eq, %arg2, %c0_i32_11 : i32
    %14 = arith.extui %13 : i1 to i32
    %c0_i32_12 = arith.constant 0 : i32
    %15 = arith.cmpi ne, %14, %c0_i32_12 : i32
    scf.if %15 {
      %c0_13 = arith.constant 0 : index
      %c0_14 = arith.constant 0 : index
      %c0_15 = arith.constant 0 : index
      %16 = vector.load %arg4[%c0_13, %c0_14, %c0_15] : memref<1x32x128xbf16, #tpu.memory_space<vmem>>, vector<1x32x128xbf16>
      %17 = vector.shape_cast %16 : vector<1x32x128xbf16> to vector<32x128xbf16>
      %c0_16 = arith.constant 0 : index
      %c0_17 = arith.constant 0 : index
      %18 = vector.load %arg5[%c0_16, %c0_17] : memref<128x256xbf16, #tpu.memory_space<vmem>>, vector<128x256xbf16>
      %cst_18 = arith.constant dense<0.000000e+00> : vector<32x256xf32>
      %19 = tpu.matmul %17, %18, %cst_18 {dimension_numbers = #tpu.dot_dimension_numbers<[1], [0], [0], [1], [0, 0, 1, 1], [], []>} : vector<32x128xbf16>, vector<128x256xbf16>, vector<32x256xf32> -> vector<32x256xf32>
      %c0_19 = arith.constant 0 : index
      %c0_20 = arith.constant 0 : index
      %c0_21 = arith.constant 0 : index
      %20 = vector.load %arg8[%c0_19, %c0_20, %c0_21] : memref<1x32x256xf32, #tpu.memory_space<vmem>>, vector<1x32x256xf32>
      %21 = vector.shape_cast %20 : vector<1x32x256xf32> to vector<32x256xf32>
      %22 = arith.addf %21, %19 : vector<32x256xf32>
      %c0_22 = arith.constant 0 : index
      %c0_23 = arith.constant 0 : index
      %23 = vector.load %arg7[%c0_22, %c0_23] : memref<32x1xf32, #tpu.memory_space<vmem>>, vector<32x1xf32>
      %24 = vector.broadcast %23 : vector<32x1xf32> to vector<32x256xf32>
      %25 = arith.addf %22, %24 : vector<32x256xf32>
      %cst_24 = arith.constant 0.000000e+00 : f32
      %26 = vector.broadcast %cst_24 : f32 to vector<32x256xf32>
      %27 = arith.maximumf %25, %26 : vector<32x256xf32>
      %28 = tpu.iota {dimensions = array<i32: 1>} : vector<32x256xi32>
      %c256_i32 = arith.constant 256 : i32
      %29 = vector.broadcast %c256_i32 : i32 to vector<32x256xi32>
      %30 = arith.cmpi slt, %28, %29 : vector<32x256xi32>
      %cst_25 = arith.constant 0.000000e+00 : f32
      %31 = vector.broadcast %cst_25 : f32 to vector<32x256xf32>
      %32 = arith.select %30, %27, %31 : vector<32x256xi1>, vector<32x256xf32>
      %c0_26 = arith.constant 0 : index
      %c0_27 = arith.constant 0 : index
      %c0_28 = arith.constant 0 : index
      %33 = vector.load %arg8[%c0_26, %c0_27, %c0_28] : memref<1x32x256xf32, #tpu.memory_space<vmem>>, vector<1x32x256xf32>
      %34 = vector.shape_cast %33 : vector<1x32x256xf32> to vector<32x256xf32>
      %35 = vector.shape_cast %32 : vector<32x256xf32> to vector<1x32x256xf32>
      tpu.vector_store %arg8[%c0_26, %c0_27, %c0_28], %35 {strides = array<i32>} : memref<1x32x256xf32, #tpu.memory_space<vmem>>, vector<1x32x256xf32>,
    } else {
    }
    return
  }
  func.func @transform_0(%arg0: i32, %arg1: i32, %arg2: i32) -> (i32, i32, i32) {
    %c0_i32 = arith.constant 0 : i32
    %c0_i32_0 = arith.constant 0 : i32
    return %arg0, %arg2, %c0_i32 : i32, i32, i32
  }
  func.func @transform_1(%arg0: i32, %arg1: i32, %arg2: i32) -> (i32, i32, i32) {
    %c0_i32 = arith.constant 0 : i32
    %c0_i32_0 = arith.constant 0 : i32
    return %arg0, %arg1, %c0_i32 : i32, i32, i32
  }
  func.func @transform_2(%arg0: i32, %arg1: i32, %arg2: i32) -> (i32, i32) {
    %c0_i32 = arith.constant 0 : i32
    %c0_i32_0 = arith.constant 0 : i32
    %c0_i32_1 = arith.constant 0 : i32
    return %c0_i32, %c0_i32_0 : i32, i32
  }
  func.func @transform_3(%arg0: i32, %arg1: i32, %arg2: i32) -> (i32, i32) {
    %c0_i32 = arith.constant 0 : i32
    return %arg1, %arg2 : i32, i32
  }
  func.func @transform_4(%arg0: i32, %arg1: i32, %arg2: i32) -> (i32, i32) {
    %c0_i32 = arith.constant 0 : i32
    %c0_i32_0 = arith.constant 0 : i32
    return %arg1, %c0_i32 : i32, i32
  }
  func.func @transform_5(%arg0: i32, %arg1: i32, %arg2: i32) -> (i32, i32, i32) {
    %c0_i32 = arith.constant 0 : i32
    %c0_i32_0 = arith.constant 0 : i32
    return %arg0, %arg1, %c0_i32 : i32, i32, i32
  }
}

</mosaic_0001>

<llo_original>
// kernel: tpu_custom_call.1
$region0: #{tpu_custom_call.1}
  #allocation0 [shape = 'u32[]', space=smem, size = 0x4, offset = 0x4, fixed_abs, tag = 'smem constant byte address 0x4 - core index']
  #allocation1 [shape = 'u32[72,128]{1,0:T(1,128)}', space=vmem, size = 0x9000, scoped, tag = 'internal scratch']
  %s0 = inlined_call_operand.vmem [shape: bf16[2,4,256], index: 0, kind: input, shape index: {}]
  %s1 = inlined_call_operand.vmem [shape: bf16[2,32,128], index: 1, kind: input, shape index: {}]
  %s2 = inlined_call_operand.hbm [shape: bf16[128,256], index: 2, kind: input, shape index: {}]
  %s3 = inlined_call_operand.vmem [shape: bf16[32,4], index: 3, kind: input, shape index: {}]
  %s4 = inlined_call_operand.vmem [shape: f32[32,1], index: 4, kind: input, shape index: {}]
  %s5 = inlined_call_operand.hbm [shape: f32[2,32,256], index: 5, kind: output, shape index: {}]
  %s6 = sld [smem:[#allocation0]]
  $region65: #{tpu_custom_call.1} parent=0
    _
  %s8 = ssub.s32 1, %s6
  %s9 = scalar_select 0, %s8, %s6
  $region1: #{tpu_custom_call.1} parent=0
    #allocation2 [shape = 'u8[65536]{0}', space=vmem, size = 0x10000, scoped, tag = 'input window, operand 2, single buffered']
    #allocation3 [shape = 's32[2]{0}', space=sflag, size = 0x8, scoped, tag = 'scoped memory for tpu_custom_call.1']
    #allocation4 [shape = 's32[2]{0}', space=sflag, size = 0x8, scoped, tag = 'scoped memory for tpu_custom_call.1']
    #allocation5 [shape = 'u8[65536]{0}', space=vmem, size = 0x10000, scoped, tag = 'output window, operand 0']
    %10 = vsyncpa [#allocation3], 0
    %11 = vsyncpa [#allocation4], 0
    %s12 = scalar_lea.sflag [#allocation4], 1
    %13 = vsyncpa %s12, 0
    loop: start=0, step=1, limit=4
    $region2: #{tpu_custom_call.1} parent=1 // loop_pre_header
      _
    $region3: #{tpu_custom_call.1} parent=1 // loop_header
      %s15 = sphi 0, %s19
      %p16 = scmp.ge.s32.totalorder %s15, 4
      %s22 = sphi 0, %s41
      %s23 = sphi 0, %s37
      %s24 = sphi 0, %s33
      %s25 = sphi 0, %s22
      %s26 = sphi 0, %s23
      %s27 = sphi 0, %s24
      %s28 = sphi 0, %s25
      %s29 = sphi 0, %s26
      %s30 = sphi 0, %s27
      %s46 = sphi 0, %s48
      %s49 = sphi 0, %s46
      %s50 = sphi 0, %s49
      %s66 = sphi 0, %s50
      %s74 = sphi 0, %s76
      %s77 = sphi 0, %s74
      %s78 = sphi 0, %s77
      %s94 = sphi 0, %s78
      %s98 = sphi 0, %s98
      %s100 = sphi 0, %s98
      %s101 = sphi 0, %s100
      %s115 = sphi 0, %s101
      %s123 = sphi 0, %s125
      %s126 = sphi 0, %s123
      %s127 = sphi 0, %s126
      %s143 = sphi 0, %s127
      %s149 = sphi 0, %s151
      %s152 = sphi 0, %s149
      %s153 = sphi 0, %s152
      %s169 = sphi 0, %s153
      %s177 = sphi 0, %s179
      %s180 = sphi 0, %s177
      %s181 = sphi 0, %s180
      %s197 = sphi 0, %s181
    $region4: #{tpu_custom_call.1} parent=1 // loop_header_branch
      %18 = sbr.rel (%p16) target = $region8
    $region5: #{tpu_custom_call.1} parent=1 // loop_body
      %s20 = ssub.s32 %s15, 1
      %s21 = ssub.s32 %s15, 2
      %s31 = sadd.s32 1, %s24
      %p32 = scmp.ge.s32.totalorder %s31, 1
      %s33 = scalar_select %p32, 0, %s31
      %s34 = sadd.s32 1, %s23
      %s35 = scalar_select %p32, %s34, %s23
      %p36 = scmp.ge.s32.totalorder %s35, 1
      %s37 = scalar_select %p36, 0, %s35
      %s38 = sadd.s32 1, %s22
      %s39 = scalar_select %p36, %s38, %s22
      %p40 = scmp.ge.s32.totalorder %s39, 2
      %s41 = scalar_select %p40, 0, %s39
      %s42 = ssub.s32 %s22, %s41
      %s43 = ssub.s32 %s24, %s33
      %s44 = sor.u32 %s42, %s43
      %p45 = scmp.eq.s32.totalorder %s44, 0
      %s47 = sadd.s32 %s46, 1
      %s48 = scalar_select %p45, %s46, %s47
      %p51 = pneg %p45
      %p52 = scmp.eq.s32.totalorder %s15, 1
      %p53 = por %p51, %p52
      %p54 = scmp.ne.s32.totalorder %s46, %s49
      %p55 = scmp.eq.s32.totalorder %s15, 0
      %p56 = por %p54, %p55
      %p57 = scmp.ne.s32.totalorder %s46, %s49
      %p58 = scmp.eq.s32.totalorder %s20, 1
      %p59 = por %p57, %p58
      %p60 = scmp.ne.s32.totalorder %s49, %s50
      %p61 = scmp.eq.s32.totalorder %s20, 0
      %p62 = por %p60, %p61
      %p63 = scmp.ne.s32.totalorder %s49, %s50
      %p64 = scmp.eq.s32.totalorder %s21, 1
      %p65 = por %p63, %p64
      %p67 = scmp.ne.s32.totalorder %s50, %s66
      %p68 = scmp.eq.s32.totalorder %s21, 0
      %p69 = por %p67, %p68
      %s70 = ssub.s32 %s22, %s41
      %s71 = ssub.s32 %s23, %s37
      %s72 = sor.u32 %s70, %s71
      %p73 = scmp.eq.s32.totalorder %s72, 0
      %s75 = sadd.s32 %s74, 1
      %s76 = scalar_select %p73, %s74, %s75
      %p79 = pneg %p73
      %p80 = scmp.eq.s32.totalorder %s15, 1
      %p81 = por %p79, %p80
      %p82 = scmp.ne.s32.totalorder %s74, %s77
      %p83 = scmp.eq.s32.totalorder %s15, 0
      %p84 = por %p82, %p83
      %p85 = scmp.ne.s32.totalorder %s74, %s77
      %p86 = scmp.eq.s32.totalorder %s20, 1
      %p87 = por %p85, %p86
      %p88 = scmp.ne.s32.totalorder %s77, %s78
      %p89 = scmp.eq.s32.totalorder %s20, 0
      %p90 = por %p88, %p89
      %p91 = scmp.ne.s32.totalorder %s77, %s78
      %p92 = scmp.eq.s32.totalorder %s21, 1
      %p93 = por %p91, %p92
      %p95 = scmp.ne.s32.totalorder %s78, %s94
      %p96 = scmp.eq.s32.totalorder %s21, 0
      %p97 = por %p95, %p96
      %s99 = sadd.s32 %s98, 1
      %p102 = scmp.eq.s32.totalorder %s15, 1
      %p103 = scmp.ne.s32.totalorder %s98, %s100
      %p104 = scmp.eq.s32.totalorder %s15, 0
      %p105 = por %p103, %p104
      %p106 = scmp.ne.s32.totalorder %s98, %s100
      %p107 = scmp.eq.s32.totalorder %s20, 1
      %p108 = por %p106, %p107
      %p109 = scmp.ne.s32.totalorder %s100, %s101
      %p110 = scmp.eq.s32.totalorder %s20, 0
      %p111 = por %p109, %p110
      %p112 = scmp.ne.s32.totalorder %s100, %s101
      %p113 = scmp.eq.s32.totalorder %s21, 1
      %p114 = por %p112, %p113
      %p116 = scmp.ne.s32.totalorder %s101, %s115
      %p117 = scmp.eq.s32.totalorder %s21, 0
      %p118 = por %p116, %p117
      %s119 = ssub.s32 %s23, %s37
      %s120 = ssub.s32 %s24, %s33
      %s121 = sor.u32 %s119, %s120
      %p122 = scmp.eq.s32.totalorder %s121, 0
      %s124 = sadd.s32 %s123, 1
      %s125 = scalar_select %p122, %s123, %s124
      %p128 = pneg %p122
      %p129 = scmp.eq.s32.totalorder %s15, 1
      %p130 = por %p128, %p129
      %p131 = scmp.ne.s32.totalorder %s123, %s126
      %p132 = scmp.eq.s32.totalorder %s15, 0
      %p133 = por %p131, %p132
      %p134 = scmp.ne.s32.totalorder %s123, %s126
      %p135 = scmp.eq.s32.totalorder %s20, 1
      %p136 = por %p134, %p135
      %p137 = scmp.ne.s32.totalorder %s126, %s127
      %p138 = scmp.eq.s32.totalorder %s20, 0
      %p139 = por %p137, %p138
      %p140 = scmp.ne.s32.totalorder %s126, %s127
      %p141 = scmp.eq.s32.totalorder %s21, 1
      %p142 = por %p140, %p141
      %p144 = scmp.ne.s32.totalorder %s127, %s143
      %p145 = scmp.eq.s32.totalorder %s21, 0
      %p146 = por %p144, %p145
      %s147 = ssub.s32 %s23, %s37
      %p148 = scmp.eq.s32.totalorder %s147, 0
      %s150 = sadd.s32 %s149, 1
      %s151 = scalar_select %p148, %s149, %s150
      %p154 = pneg %p148
      %p155 = scmp.eq.s32.totalorder %s15, 1
      %p156 = por %p154, %p155
      %p157 = scmp.ne.s32.totalorder %s149, %s152
      %p158 = scmp.eq.s32.totalorder %s15, 0
      %p159 = por %p157, %p158
      %p160 = scmp.ne.s32.totalorder %s149, %s152
      %p161 = scmp.eq.s32.totalorder %s20, 1
      %p162 = por %p160, %p161
      %p163 = scmp.ne.s32.totalorder %s152, %s153
      %p164 = scmp.eq.s32.totalorder %s20, 0
      %p165 = por %p163, %p164
      %p166 = scmp.ne.s32.totalorder %s152, %s153
      %p167 = scmp.eq.s32.totalorder %s21, 1
      %p168 = por %p166, %p167
      %p170 = scmp.ne.s32.totalorder %s153, %s169
      %p171 = scmp.eq.s32.totalorder %s21, 0
      %p172 = por %p170, %p171
      %s173 = ssub.s32 %s22, %s41
      %s174 = ssub.s32 %s23, %s37
      %s175 = sor.u32 %s173, %s174
      %p176 = scmp.eq.s32.totalorder %s175, 0
      %s178 = sadd.s32 %s177, 1
      %s179 = scalar_select %p176, %s177, %s178
      %p182 = pneg %p176
      %p183 = scmp.eq.s32.totalorder %s15, 1
      %p184 = por %p182, %p183
      %p185 = scmp.ne.s32.totalorder %s177, %s180
      %p186 = scmp.eq.s32.totalorder %s15, 0
      %p187 = por %p185, %p186
      %p188 = scmp.ne.s32.totalorder %s177, %s180
      %p189 = scmp.eq.s32.totalorder %s20, 1
      %p190 = por %p188, %p189
      %p191 = scmp.ne.s32.totalorder %s180, %s181
      %p192 = scmp.eq.s32.totalorder %s20, 0
      %p193 = por %p191, %p192
      %p194 = scmp.ne.s32.totalorder %s180, %s181
      %p195 = scmp.eq.s32.totalorder %s21, 1
      %p196 = por %p194, %p195
      %p198 = scmp.ne.s32.totalorder %s181, %s197
      %p199 = scmp.eq.s32.totalorder %s21, 0
      %p200 = por %p198, %p199
      %p201 = scmp.le.s32.totalorder 1, %s15
      %p202 = scmp.lt.s32.totalorder %s15, 3
      %p203 = pnand %p201, %p202
      %p204 = pneg %p203
      // Predicated region
      $region9: #{tpu_custom_call.1} parent=5 // pred_check
        _
      $region10: #{tpu_custom_call.1} parent=5 // pred_check_branch
        %206 = sbr.rel (%p203) target = $region12
      $region11: #{tpu_custom_call.1} parent=5 // pred_region
        %s207 = ssub.s32 %s15, 1
        // Predicated region
        $region13: #{tpu_custom_call.1} parent=11 // pred_check
          %p208 = pneg %p111
        $region14: #{tpu_custom_call.1} parent=11 // pred_check_branch
          %210 = sbr.rel (%p208) target = $region16
        $region15: #{tpu_custom_call.1} parent=11 // pred_region
          %212 = vsyncadd [#allocation3], 0
          %s213 = sshll.u32 %s2, 4
          %s214 = int_to_ptr.hbm [resolvable:$true] %s213
          %s215 = sshll.u32 [#allocation2], 4
          %s216 = int_to_ptr.vmem [resolvable:$true] %s215
          %221 = dma.hbm_to_vmem [thread:$0]  %s214, 2048, %s216, [#allocation3], 128, 128, 8
        $region16: #{tpu_custom_call.1} parent=11 // pred_fallthru
          _
        // Predicated region
        $region17: #{tpu_custom_call.1} parent=11 // pred_check
          %p222 = pneg %p139
        $region18: #{tpu_custom_call.1} parent=11 // pred_check_branch
          %224 = sbr.rel (%p222) target = $region20
        $region19: #{tpu_custom_call.1} parent=11 // pred_region
          %s225 = smul.u32 4, %s26
          %p226 = scmp.lt.s32.totalorder %s225, 3
          %s227 = scalar_select %p226, %s225, 3
          %p228 = scmp.lt.s32.totalorder %s27, 0
          %s229 = scalar_select %p228, %s27, 0
          %s230 = sadd.s32 %s229, %s227
          %s231 = smul.addr %s230, 4
          %s232 = scalar_lea.vmem %s3, %s231
          %s233 = smul.u32 4, %s26
        $region20: #{tpu_custom_call.1} parent=11 // pred_fallthru
          _
        // Predicated region
        $region21: #{tpu_custom_call.1} parent=11 // pred_check
          %p234 = pneg %p165
        $region22: #{tpu_custom_call.1} parent=11 // pred_check_branch
          %236 = sbr.rel (%p234) target = $region24
        $region23: #{tpu_custom_call.1} parent=11 // pred_region
          %s237 = smul.u32 4, %s26
          %p238 = scmp.lt.s32.totalorder %s237, 3
          %s239 = scalar_select %p238, %s237, 3
          %s240 = smul.addr %s239, 8
          %s241 = scalar_lea.vmem %s4, %s240
          %s242 = smul.u32 4, %s26
        $region24: #{tpu_custom_call.1} parent=11 // pred_fallthru
          _
      $region12: #{tpu_custom_call.1} parent=5 // pred_fallthru
        _
      %p243 = scmp.lt.s32.totalorder %s15, 2
      // Predicated region
      $region25: #{tpu_custom_call.1} parent=5 // pred_check
        %p244 = pneg %p243
      $region26: #{tpu_custom_call.1} parent=5 // pred_check_branch
        %246 = sbr.rel (%p244) target = $region28
      $region27: #{tpu_custom_call.1} parent=5 // pred_region
        // Predicated region
        $region29: #{tpu_custom_call.1} parent=27 // pred_check
          %p247 = pneg %p56
        $region30: #{tpu_custom_call.1} parent=27 // pred_check_branch
          %249 = sbr.rel (%p247) target = $region32
        $region31: #{tpu_custom_call.1} parent=27 // pred_region
          %p250 = scmp.lt.s32.totalorder %s22, 1
          %s251 = scalar_select %p250, %s22, 1
          %p252 = scmp.lt.s32.totalorder %s24, 0
          %s253 = scalar_select %p252, %s24, 0
          %s254 = smul.addr %s253, 2
          %s255 = smul.addr %s251, 2
          %s256 = sadd.s32 %s254, %s255
          %s257 = smul.addr %s256, 2
          %s258 = scalar_lea.vmem %s0, %s257
        $region32: #{tpu_custom_call.1} parent=27 // pred_fallthru
          _
        // Predicated region
        $region33: #{tpu_custom_call.1} parent=27 // pred_check
          %p259 = pneg %p84
        $region34: #{tpu_custom_call.1} parent=27 // pred_check_branch
          %261 = sbr.rel (%p259) target = $region36
        $region35: #{tpu_custom_call.1} parent=27 // pred_region
          %s262 = smul.u32 4, %s23
          %p263 = scmp.lt.s32.totalorder %s22, 1
          %s264 = scalar_select %p263, %s22, 1
          %p265 = scmp.lt.s32.totalorder %s262, 3
          %s266 = scalar_select %p265, %s262, 3
          %s267 = smul.addr %s264, 4
          %s268 = sadd.s32 %s266, %s267
          %s269 = smul.addr %s268, 4
          %s270 = scalar_lea.vmem %s1, %s269
          %s271 = smul.u32 4, %s23
        $region36: #{tpu_custom_call.1} parent=27 // pred_fallthru
          _
      $region28: #{tpu_custom_call.1} parent=5 // pred_fallthru
        _
      %p272 = scmp.le.s32.totalorder 1, %s15
      %p273 = scmp.lt.s32.totalorder %s15, 3
      %p274 = pnand %p272, %p273
      %p275 = pneg %p274
      // Predicated region
      $region37: #{tpu_custom_call.1} parent=5 // pred_check
        _
      $region38: #{tpu_custom_call.1} parent=5 // pred_check_branch
        %277 = sbr.rel (%p274) target = $region40
      $region39: #{tpu_custom_call.1} parent=5 // pred_region
        %s278 = ssub.s32 %s15, 1
        // Predicated region
        $region41: #{tpu_custom_call.1} parent=39 // pred_check
          %p279 = pneg %p111
        $region42: #{tpu_custom_call.1} parent=39 // pred_check_branch
          %281 = sbr.rel (%p279) target = $region44
        $region43: #{tpu_custom_call.1} parent=39 // pred_region
          %283 = dma.done [#allocation3], 2048
        $region44: #{tpu_custom_call.1} parent=39 // pred_fallthru
          _
        %p284 = scmp.lt.s32.totalorder %s25, 1
        %s285 = scalar_select %p284, %s25, 1
        %p286 = scmp.lt.s32.totalorder %s27, 0
        %s287 = scalar_select %p286, %s27, 0
        %s288 = smul.addr %s287, 2
        %s289 = smul.addr %s285, 2
        %s290 = sadd.s32 %s288, %s289
        %s291 = smul.addr %s290, 2
        %s292 = scalar_lea.vmem %s0, %s291
        %p293 = pneg %p62
        %p294 = pneg %p59
        %s295 = smul.u32 4, %s26
        %p296 = scmp.lt.s32.totalorder %s25, 1
        %s297 = scalar_select %p296, %s25, 1
        %p298 = scmp.lt.s32.totalorder %s295, 3
        %s299 = scalar_select %p298, %s295, 3
        %s300 = smul.addr %s297, 4
        %s301 = sadd.s32 %s299, %s300
        %s302 = smul.addr %s301, 4
        %s303 = scalar_lea.vmem %s1, %s302
        %p304 = pneg %p90
        %p305 = pneg %p87
        %p306 = pneg %p111
        %p307 = pneg %p108
        %s308 = smul.u32 4, %s26
        %p309 = scmp.lt.s32.totalorder %s308, 3
        %s310 = scalar_select %p309, %s308, 3
        %p311 = scmp.lt.s32.totalorder %s27, 0
        %s312 = scalar_select %p311, %s27, 0
        %s313 = sadd.s32 %s312, %s310
        %s314 = smul.addr %s313, 4
        %s315 = scalar_lea.vmem %s3, %s314
        %p316 = pneg %p139
        %p317 = pneg %p136
        %s318 = smul.u32 4, %s26
        %p319 = scmp.lt.s32.totalorder %s318, 3
        %s320 = scalar_select %p319, %s318, 3
        %s321 = smul.addr %s320, 8
        %s322 = scalar_lea.vmem %s4, %s321
        %p323 = pneg %p165
        %p324 = pneg %p162
        %p325 = pneg %p193
        %p326 = pneg %p190
        %s327 = sand.u32 %s180, 1
        %s328 = scalar_lea.sflag [#allocation4], %s327
        %s329 = sand.u32 %s180, 1
        %s330 = smul.addr %s329, 64
        %s331 = scalar_lea.vmem [#allocation5], %s330
        %p332 = scmp.lt.s32.totalorder %s25, 1
        %s333 = scalar_select %p332, %s25, 1
        %p334 = scmp.lt.s32.totalorder %s27, 0
        %s335 = scalar_select %p334, %s27, 0
        %s336 = smul.addr %s335, 2
        %s337 = smul.addr %s333, 2
        %s338 = sadd.s32 %s336, %s337
        %s339 = smul.addr %s338, 2
        %s340 = scalar_lea.vmem %s0, %s339
        %s341 = smul.u32 4, %s26
        %p342 = scmp.lt.s32.totalorder %s25, 1
        %s343 = scalar_select %p342, %s25, 1
        %p344 = scmp.lt.s32.totalorder %s341, 3
        %s345 = scalar_select %p344, %s341, 3
        %s346 = smul.addr %s343, 4
        %s347 = sadd.s32 %s345, %s346
        %s348 = smul.addr %s347, 4
        %s349 = scalar_lea.vmem %s1, %s348
        %s350 = smul.u32 4, %s26
        %s351 = smul.u32 4, %s26
        %p352 = scmp.lt.s32.totalorder %s351, 3
        %s353 = scalar_select %p352, %s351, 3
        %p354 = scmp.lt.s32.totalorder %s27, 0
        %s355 = scalar_select %p354, %s27, 0
        %s356 = sadd.s32 %s355, %s353
        %s357 = smul.addr %s356, 4
        %s358 = scalar_lea.vmem %s3, %s357
        %s359 = smul.u32 4, %s26
        %s360 = smul.u32 4, %s26
        %p361 = scmp.lt.s32.totalorder %s360, 3
        %s362 = scalar_select %p361, %s360, 3
        %s363 = smul.addr %s362, 8
        %s364 = scalar_lea.vmem %s4, %s363
        %s365 = smul.u32 4, %s26
        %s366 = smul.u32 4, %s26
        %p368 = scmp.eq.s32.totalorder %s27, 0
        // Predicated region
        $region45: #{tpu_custom_call.1} parent=39 // pred_check
          %p369 = pneg %p368
        $region46: #{tpu_custom_call.1} parent=39 // pred_check_branch
          %371 = sbr.rel (%p369) target = $region48
        $region47: #{tpu_custom_call.1} parent=39 // pred_region
          %372 = vst [vmem:[%s331] sm:$0xff] 0.0
          %373 = vst [vmem:[%s331 + $0x8] sm:$0xff] 0.0
          %374 = vst [vmem:[%s331 + $0x10] sm:$0xff] 0.0
          %375 = vst [vmem:[%s331 + $0x18] sm:$0xff] 0.0
          %376 = vst [vmem:[%s331 + $0x20] sm:$0xff] 0.0
          %377 = vst [vmem:[%s331 + $0x28] sm:$0xff] 0.0
          %378 = vst [vmem:[%s331 + $0x30] sm:$0xff] 0.0
          %379 = vst [vmem:[%s331 + $0x38] sm:$0xff] 0.0
        $region48: #{tpu_custom_call.1} parent=39 // pred_fallthru
          _
        %v380 = vld [vmem:[%s331] sm:$0xff]
        %v381 = vld [vmem:[%s331 + $0x8] sm:$0xff]
        %v382 = vld [vmem:[%s331 + $0x10] sm:$0xff]
        %v383 = vld [vmem:[%s331 + $0x18] sm:$0xff]
        %v384 = vld [vmem:[%s331 + $0x20] sm:$0xff]
        %v385 = vld [vmem:[%s331 + $0x28] sm:$0xff]
        %v386 = vld [vmem:[%s331 + $0x30] sm:$0xff]
        %v387 = vld [vmem:[%s331 + $0x38] sm:$0xff]
        %v388 = vld [vmem:[%s358] sm:$0xf]
        %v389 = vld [vmem:[%s358 + $0x4] sm:$0xf]
        %v390 = vld [vmem:[%s358 + $0x8] sm:$0xf]
        %v391 = vld [vmem:[%s358 + $0xc] sm:$0xf]
        %v392 = vld [vmem:[%s340] sm:$0xf]
        %v397 = vunpack.c.l.b16 %v388
        %v398 = vunpack.c.l.b16 %v389
        %v399 = vunpack.c.l.b16 %v390
        %v400 = vunpack.c.l.b16 %v391
        %v401 = vpack.c.b16 %v398, %v397
        %v402 = vpack.c.b16 %v400, %v399
        %404 = vst [vmem:[#allocation1] ss:$4 sm:$0xff] %v392
        %v405 = vld.sshfl [vmem:[#allocation1] sm:$0xff pattern:$0x73625140]
        %v406 = vld.sshfl [vmem:[#allocation1 + $0x8] sm:$0xff pattern:$0x73625140]
        %vm407 = vcmask 31744
        %v409 = vsel %vm407, %v401, 0
        %v412 = vsel %vm407, %v402, 0
        %vm414 = vcmask 1041408
        %v415 = vsel %vm414, %v405, 0
        %v417 = vsel %vm414, %v406, 0
        %419 = vmatpush.bf16.msra.mxu0 0
        %420 = vmatpush.bf16.msra.mxu0 0
        %421 = vmatpush.bf16.msra.mxu0 0
        %422 = vmatpush.bf16.msra.mxu0 0
        %423 = vmatpush.bf16.msra.mxu0 0
        %424 = vmatpush.bf16.msra.mxu0 0
        %425 = vmatpush.bf16.msra.mxu0 0
        %426 = vmatpush.bf16.msra.mxu0 %v415
        %427 = vmatmul.bf16.gmra.mxu0 %v409
        %v428 = vpop.f32.mrf.mxu0
        %v429 = vadd.f32 0.0, %v428
        %v430 = vpop.f32.mrf.mxu0
        %v431 = vadd.f32 0.0, %v430
        %432 = vmatmul.bf16.gmra.mxu0 %v412
        %v433 = vpop.f32.mrf.mxu0
        %v434 = vadd.f32 0.0, %v433
        %v435 = vpop.f32.mrf.mxu0
        %v436 = vadd.f32 0.0, %v435
        %437 = vdwg.mxu0
        %438 = vmatpush.bf16.msra.mxu0 0
        %439 = vmatpush.bf16.msra.mxu0 0
        %440 = vmatpush.bf16.msra.mxu0 0
        %441 = vmatpush.bf16.msra.mxu0 0
        %442 = vmatpush.bf16.msra.mxu0 0
        %443 = vmatpush.bf16.msra.mxu0 0
        %444 = vmatpush.bf16.msra.mxu0 0
        %445 = vmatpush.bf16.msra.mxu0 %v417
        %446 = vmatmul.bf16.gmra.mxu0 %v409
        %v447 = vpop.f32.mrf.mxu0
        %v448 = vadd.f32 0.0, %v447
        %v449 = vpop.f32.mrf.mxu0
        %v450 = vadd.f32 0.0, %v449
        %451 = vmatmul.bf16.gmra.mxu0 %v412
        %v452 = vpop.f32.mrf.mxu0
        %v453 = vadd.f32 0.0, %v452
        %v454 = vpop.f32.mrf.mxu0
        %v455 = vadd.f32 0.0, %v454
        %456 = vdwg.mxu0
        %v457 = vadd.f32 %v380, %v429
        %v458 = vadd.f32 %v381, %v448
        %v459 = vadd.f32 %v382, %v431
        %v460 = vadd.f32 %v383, %v450
        %v461 = vadd.f32 %v384, %v434
        %v462 = vadd.f32 %v385, %v453
        %v463 = vadd.f32 %v386, %v436
        %v464 = vadd.f32 %v387, %v455
        %465 = vst [vmem:[%s331] sm:$0xff] %v457
        %466 = vst [vmem:[%s331 + $0x8] sm:$0xff] %v458
        %467 = vst [vmem:[%s331 + $0x10] sm:$0xff] %v459
        %468 = vst [vmem:[%s331 + $0x18] sm:$0xff] %v460
        %469 = vst [vmem:[%s331 + $0x20] sm:$0xff] %v461
        %470 = vst [vmem:[%s331 + $0x28] sm:$0xff] %v462
        %471 = vst [vmem:[%s331 + $0x30] sm:$0xff] %v463
        %472 = vst [vmem:[%s331 + $0x38] sm:$0xff] %v464
        // Predicated region
        $region49: #{tpu_custom_call.1} parent=39 // pred_check
          %p473 = pneg %p368
        $region50: #{tpu_custom_call.1} parent=39 // pred_check_branch
          %475 = sbr.rel (%p473) target = $region52
        $region51: #{tpu_custom_call.1} parent=39 // pred_region
          %v476 = vld [vmem:[%s349] sm:$0xf]
          %v477 = vld [vmem:[%s349 + $0x4] sm:$0xf]
          %v478 = vld [vmem:[%s349 + $0x8] sm:$0xf]
          %v479 = vld [vmem:[%s349 + $0xc] sm:$0xf]
          %v480 = vld [vmem:[#allocation2] sm:$0xff]
          %v481 = vld [vmem:[#allocation2 + $0x8] sm:$0xff]
          %v482 = vld [vmem:[#allocation2 + $0x10] sm:$0xff]
          %v483 = vld [vmem:[#allocation2 + $0x18] sm:$0xff]
          %v484 = vld [vmem:[#allocation2 + $0x20] sm:$0xff]
          %v485 = vld [vmem:[#allocation2 + $0x28] sm:$0xff]
          %v486 = vld [vmem:[#allocation2 + $0x30] sm:$0xff]
          %v487 = vld [vmem:[#allocation2 + $0x38] sm:$0xff]
          %v488 = vld [vmem:[#allocation2 + $0x40] sm:$0xff]
          %v489 = vld [vmem:[#allocation2 + $0x48] sm:$0xff]
          %v490 = vld [vmem:[#allocation2 + $0x50] sm:$0xff]
          %v491 = vld [vmem:[#allocation2 + $0x58] sm:$0xff]
          %v492 = vld [vmem:[#allocation2 + $0x60] sm:$0xff]
          %v493 = vld [vmem:[#allocation2 + $0x68] sm:$0xff]
          %v494 = vld [vmem:[#allocation2 + $0x70] sm:$0xff]
          %v495 = vld [vmem:[#allocation2 + $0x78] sm:$0xff]
          %v500 = vunpack.c.l.b16 %v476
          %v501 = vunpack.c.l.b16 %v477
          %v502 = vunpack.c.l.b16 %v478
          %v503 = vunpack.c.l.b16 %v479
          %v504 = vpack.c.b16 %v501, %v500
          %v505 = vpack.c.b16 %v503, %v502
          %v524 = vunpack.c.l.b16 %v480
          %v525 = vunpack.c.h.b16 %v480
          %v526 = vunpack.c.l.b16 %v481
          %v527 = vunpack.c.h.b16 %v481
          %v528 = vunpack.c.l.b16 %v482
          %v529 = vunpack.c.h.b16 %v482
          %v530 = vunpack.c.l.b16 %v483
          %v531 = vunpack.c.h.b16 %v483
          %v532 = vunpack.c.l.b16 %v484
          %v533 = vunpack.c.h.b16 %v484
          %v534 = vunpack.c.l.b16 %v485
          %v535 = vunpack.c.h.b16 %v485
          %v536 = vunpack.c.l.b16 %v486
          %v537 = vunpack.c.h.b16 %v486
          %v538 = vunpack.c.l.b16 %v487
          %v539 = vunpack.c.h.b16 %v487
          %v540 = vunpack.c.l.b16 %v488
          %v541 = vunpack.c.h.b16 %v488
          %v542 = vunpack.c.l.b16 %v489
          %v543 = vunpack.c.h.b16 %v489
          %v544 = vunpack.c.l.b16 %v490
          %v545 = vunpack.c.h.b16 %v490
          %v546 = vunpack.c.l.b16 %v491
          %v547 = vunpack.c.h.b16 %v491
          %v548 = vunpack.c.l.b16 %v492
          %v549 = vunpack.c.h.b16 %v492
          %v550 = vunpack.c.l.b16 %v493
          %v551 = vunpack.c.h.b16 %v493
          %v552 = vunpack.c.l.b16 %v494
          %v553 = vunpack.c.h.b16 %v494
          %v554 = vunpack.c.l.b16 %v495
          %v555 = vunpack.c.h.b16 %v495
          %v556 = vpack.c.b16 %v526, %v524
          %v557 = vpack.c.b16 %v527, %v525
          %v558 = vpack.c.b16 %v530, %v528
          %v559 = vpack.c.b16 %v531, %v529
          %v560 = vpack.c.b16 %v534, %v532
          %v561 = vpack.c.b16 %v535, %v533
          %v562 = vpack.c.b16 %v538, %v536
          %v563 = vpack.c.b16 %v539, %v537
          %v564 = vpack.c.b16 %v542, %v540
          %v565 = vpack.c.b16 %v543, %v541
          %v566 = vpack.c.b16 %v546, %v544
          %v567 = vpack.c.b16 %v547, %v545
          %v568 = vpack.c.b16 %v550, %v548
          %v569 = vpack.c.b16 %v551, %v549
          %v570 = vpack.c.b16 %v554, %v552
          %v571 = vpack.c.b16 %v555, %v553
          %588 = vmatpush.bf16.msra.mxu0 %v570
          %589 = vmatpush.bf16.msra.mxu0 %v568
          %590 = vmatpush.bf16.msra.mxu0 %v566
          %591 = vmatpush.bf16.msra.mxu0 %v564
          %592 = vmatpush.bf16.msra.mxu0 %v562
          %593 = vmatpush.bf16.msra.mxu0 %v560
          %594 = vmatpush.bf16.msra.mxu0 %v558
          %595 = vmatpush.bf16.msra.mxu0 %v556
          %596 = vmatmul.bf16.gmra.mxu0 %v504
          %v597 = vpop.f32.mrf.mxu0
          %v598 = vadd.f32 0.0, %v597
          %v599 = vpop.f32.mrf.mxu0
          %v600 = vadd.f32 0.0, %v599
          %601 = vmatmul.bf16.gmra.mxu0 %v505
          %v602 = vpop.f32.mrf.mxu0
          %v603 = vadd.f32 0.0, %v602
          %v604 = vpop.f32.mrf.mxu0
          %v605 = vadd.f32 0.0, %v604
          %606 = vdwg.mxu0
          %607 = vmatpush.bf16.msra.mxu0 %v571
          %608 = vmatpush.bf16.msra.mxu0 %v569
          %609 = vmatpush.bf16.msra.mxu0 %v567
          %610 = vmatpush.bf16.msra.mxu0 %v565
          %611 = vmatpush.bf16.msra.mxu0 %v563
          %612 = vmatpush.bf16.msra.mxu0 %v561
          %613 = vmatpush.bf16.msra.mxu0 %v559
          %614 = vmatpush.bf16.msra.mxu0 %v557
          %615 = vmatmul.bf16.gmra.mxu0 %v504
          %v616 = vpop.f32.mrf.mxu0
          %v617 = vadd.f32 0.0, %v616
          %v618 = vpop.f32.mrf.mxu0
          %v619 = vadd.f32 0.0, %v618
          %620 = vmatmul.bf16.gmra.mxu0 %v505
          %v621 = vpop.f32.mrf.mxu0
          %v622 = vadd.f32 0.0, %v621
          %v623 = vpop.f32.mrf.mxu0
          %v624 = vadd.f32 0.0, %v623
          %625 = vdwg.mxu0
          %v626 = vld [vmem:[%s331] sm:$0xff]
          %v627 = vld [vmem:[%s331 + $0x8] sm:$0xff]
          %v628 = vld [vmem:[%s331 + $0x10] sm:$0xff]
          %v629 = vld [vmem:[%s331 + $0x18] sm:$0xff]
          %v630 = vld [vmem:[%s331 + $0x20] sm:$0xff]
          %v631 = vld [vmem:[%s331 + $0x28] sm:$0xff]
          %v632 = vld [vmem:[%s331 + $0x30] sm:$0xff]
          %v633 = vld [vmem:[%s331 + $0x38] sm:$0xff]
          %v634 = vadd.f32 %v626, %v598
          %v635 = vadd.f32 %v627, %v617
          %v636 = vadd.f32 %v628, %v600
          %v637 = vadd.f32 %v629, %v619
          %v638 = vadd.f32 %v630, %v603
          %v639 = vadd.f32 %v631, %v622
          %v640 = vadd.f32 %v632, %v605
          %v641 = vadd.f32 %v633, %v624
          %v642 = vld [vmem:[%s364] sm:$0xff]
          %v643 = vld [vmem:[%s364 + $0x8] sm:$0xff]
          %v644 = vld [vmem:[%s364 + $0x10] sm:$0xff]
          %v645 = vld [vmem:[%s364 + $0x18] sm:$0xff]
          %647 = vset.pattern.permute.xlu0 0
          %648 = vperm.xlu0 %647, %v642
          %v649 = vpop.permute.xlu0 %648
          %652 = vset.pattern.permute.xlu0 0
          %653 = vperm.xlu0 %652, %v643
          %v654 = vpop.permute.xlu0 %653
          %657 = vset.pattern.permute.xlu0 0
          %658 = vperm.xlu0 %657, %v644
          %v659 = vpop.permute.xlu0 %658
          %662 = vset.pattern.permute.xlu0 0
          %663 = vperm.xlu0 %662, %v645
          %v664 = vpop.permute.xlu0 %663
          %v666 = vadd.f32 %v634, %v649
          %v667 = vadd.f32 %v635, %v649
          %v668 = vadd.f32 %v636, %v654
          %v669 = vadd.f32 %v637, %v654
          %v670 = vadd.f32 %v638, %v659
          %v671 = vadd.f32 %v639, %v659
          %v672 = vadd.f32 %v640, %v664
          %v673 = vadd.f32 %v641, %v664
          %v674 = vmax.f32 %v666, 0.0
          %v675 = vmax.f32 %v667, 0.0
          %v676 = vmax.f32 %v668, 0.0
          %v677 = vmax.f32 %v669, 0.0
          %v678 = vmax.f32 %v670, 0.0
          %v679 = vmax.f32 %v671, 0.0
          %v680 = vmax.f32 %v672, 0.0
          %v681 = vmax.f32 %v673, 0.0
          %v682 = vlaneseq
          %v683 = vand.u32 %v682, 127
          %v684 = vadd.s32 %v683, 128
          %vm685 = vcmp.lt.s32.totalorder %v683, 256
          %vm686 = vcmp.lt.s32.totalorder %v684, 256
          %v687 = vsel %vm685, %v674, 0.0
          %v688 = vsel %vm686, %v675, 0.0
          %v689 = vsel %vm685, %v676, 0.0
          %v690 = vsel %vm686, %v677, 0.0
          %v691 = vsel %vm685, %v678, 0.0
          %v692 = vsel %vm686, %v679, 0.0
          %v693 = vsel %vm685, %v680, 0.0
          %v694 = vsel %vm686, %v681, 0.0
          %695 = vst [vmem:[%s331] sm:$0xff] %v687
          %696 = vst [vmem:[%s331 + $0x8] sm:$0xff] %v688
          %697 = vst [vmem:[%s331 + $0x10] sm:$0xff] %v689
          %698 = vst [vmem:[%s331 + $0x18] sm:$0xff] %v690
          %699 = vst [vmem:[%s331 + $0x20] sm:$0xff] %v691
          %700 = vst [vmem:[%s331 + $0x28] sm:$0xff] %v692
          %701 = vst [vmem:[%s331 + $0x30] sm:$0xff] %v693
          %702 = vst [vmem:[%s331 + $0x38] sm:$0xff] %v694
        $region52: #{tpu_custom_call.1} parent=39 // pred_fallthru
          _
        %s703 = sand.u32 %s180, 1
        %s704 = scalar_lea.sflag [#allocation4], %s703
        %s705 = sand.u32 %s180, 1
        %s706 = smul.addr %s705, 64
        %s707 = scalar_lea.vmem [#allocation5], %s706
        // Predicated region
        $region53: #{tpu_custom_call.1} parent=39 // pred_check
          %p708 = pneg %p190
        $region54: #{tpu_custom_call.1} parent=39 // pred_check_branch
          %710 = sbr.rel (%p708) target = $region56
        $region55: #{tpu_custom_call.1} parent=39 // pred_region
          %s711 = smul.u32 4, %s26
          %713 = vsyncadd %s704, 0
          %s714 = smul.addr %s711, 2
          %s715 = smul.addr %s25, 8
          %s716 = sadd.s32 %s714, %s715
          %s717 = smul.addr %s716, 8
          %s718 = scalar_lea.hbm %s5, %s717
          %s719 = sshll.u32 %s707, 4
          %s720 = int_to_ptr.vmem [resolvable:$true] %s719
          %s721 = sshll.u32 %s718, 4
          %s722 = int_to_ptr.hbm [resolvable:$true] %s721
          %727 = dma.vmem_to_hbm [thread:$0]  %s720, 1024, %s722, %s704, 256, 256, 16
        $region56: #{tpu_custom_call.1} parent=39 // pred_fallthru
          _
      $region40: #{tpu_custom_call.1} parent=5 // pred_fallthru
        _
      %p728 = scmp.le.s32.totalorder 2, %s15
      // Predicated region
      $region57: #{tpu_custom_call.1} parent=5 // pred_check
        %p729 = pneg %p728
      $region58: #{tpu_custom_call.1} parent=5 // pred_check_branch
        %731 = sbr.rel (%p729) target = $region60
      $region59: #{tpu_custom_call.1} parent=5 // pred_region
        %s732 = ssub.s32 %s15, 2
        // Predicated region
        $region61: #{tpu_custom_call.1} parent=59 // pred_check
          %p733 = pneg %p196
        $region62: #{tpu_custom_call.1} parent=59 // pred_check_branch
          %735 = sbr.rel (%p733) target = $region64
        $region63: #{tpu_custom_call.1} parent=59 // pred_region
          %s736 = sand.u32 %s181, 1
          %s737 = scalar_lea.sflag [#allocation4], %s736
          %s738 = sand.u32 %s181, 1
          %s739 = smul.addr %s738, 64
          %s740 = scalar_lea.vmem [#allocation5], %s739
          %742 = dma.done %s737, 1024
        $region64: #{tpu_custom_call.1} parent=59 // pred_fallthru
          _
      $region60: #{tpu_custom_call.1} parent=5 // pred_fallthru
        _
    $region6: #{tpu_custom_call.1} parent=1 // loop_footer
      %s19 = sadd.s32 1, %s15
    $region7: #{tpu_custom_call.1} parent=1 // loop_footer_branch
      %14 = sbr.rel target = $region3
    $region8: #{tpu_custom_call.1} parent=1 // loop_exit
      _
    %743 = vsyncpa [#allocation3], 1
    %s744 = scalar_lea.sflag [#allocation3], 1
    %745 = vsyncpa %s744, 1
    %746 = vsyncpa [#allocation4], 1
    %s747 = scalar_lea.sflag [#allocation4], 1
    %748 = vsyncpa %s747, 1

</llo_original>
